<compile_context>
chip_gen: v7x
topology: tpu7x:2x2x1
jax: 0.10.0
libtpu: 0.0.40
codegen_flags: <defaults>
</compile_context>

<pallas_src>
import jax
import jax.numpy as jnp
from jax.experimental import pallas as pl
from jax.experimental.pallas import tpu as pltpu


def _scse_gate_kernel(x_ref, ws_ref, cg_ref, out_ref):
    # x_ref : (1, C, TS)  input tile (I/O dtype)
    # ws_ref: (C, 1)      sSE 1x1x1 conv weight as a column (f32)
    # cg_ref: (1, C, 1)   precomputed cSE channel gate for this batch (f32)
    x = x_ref[0]                                       # (C, TS), I/O dtype
    ws = ws_ref[...].astype(x.dtype)                   # (C, 1)

    # sSE spatial gate: VPU multiply + sublane (XLU) reduction over C with
    # f32 accumulation.  C is small; a padded (1,C)@(C,TS) MXU dot would be
    # wasted in a purely mem-bound kernel.
    sgate = jax.nn.sigmoid(
        jnp.sum(x * ws, axis=0, keepdims=True, dtype=jnp.float32))  # (1, TS)

    # U*q + U*z = U * (q + z).  Form the combined gate in the I/O dtype so a
    # bf16 tile is never upcast to a full-tile f32 temporary.
    gate = sgate.astype(x.dtype) + cg_ref[0].astype(x.dtype)        # (C, TS)
    out_ref[0] = (x * gate).astype(out_ref.dtype)


def scse_pallas(u_ncdhw, w_s, w_sq, w_ex, *, target_tile_bytes=None):
    """scSE forward.

    u_ncdhw: (N, C, D, H, W) float32 or bfloat16 (dtype preserved in output)
    w_s:  (1, C)      sSE 1x1x1 conv weight (no bias)
    w_sq: (C//2, C)   cSE squeeze conv weight
    w_ex: (C, C//2)   cSE excitation conv weight
    target_tile_bytes: optional override of the per-tile byte budget (tests).
    """
    N, C, D, H, W = u_ncdhw.shape
    S = D * H * W
    dtype = u_ncdhw.dtype
    itemsize = jnp.dtype(dtype).itemsize
    x = u_ncdhw.reshape(N, C, S)                        # free reshape, no copy

    # ---- cSE channel gate in plain JAX (tiny (N, C) work; f32 accumulation
    # inside the reduce, no f32 copy of U in HBM). ----
    pooled = jnp.mean(x, axis=2, dtype=jnp.float32)               # (N, C)
    z = pooled @ w_sq.astype(jnp.float32).T                       # (N, C//2)
    z = z @ w_ex.astype(jnp.float32).T                            # (N, C)
    cgate = jax.nn.sigmoid(z)[..., None]                          # (N, C, 1)

    ws_col = w_s.reshape(C, 1).astype(jnp.float32)                # (C, 1)

    # ---- generation-aware tile size + VMEM limit ----
    try:
        vmem_cap = int(pltpu.get_tpu_info().vmem_capacity_bytes)
    except Exception:
        vmem_cap = 64 * 1024 * 1024           # conservative (v7x-sized)
    if vmem_cap >= 100 * 1024 * 1024:         # v5e / v6e: 128 MiB VMEM
        default_tile_bytes = 6 * 1024 * 1024
        vmem_cap_limit = 96 * 1024 * 1024
    else:                                     # v7x: 64 MiB VMEM per TensorCore
        default_tile_bytes = 3 * 1024 * 1024
        vmem_cap_limit = 48 * 1024 * 1024
    tile_budget = int(target_tile_bytes or default_tile_bytes)

    LANE = 128
    TS = max(LANE, (tile_budget // (C * itemsize)) // LANE * LANE)
    if TS >= S:
        TS = S            # single spatial tile; block == full dim is legal
    n_s_tiles = -(-S // TS)

    # VMEM: double-buffered input + output tiles at I/O width plus a generous
    # allowance for in-kernel full-tile temporaries (counted at f32 width).
    tile_bytes = C * TS * itemsize
    need = 4 * tile_bytes + 4 * (C * TS * 4) + (2 << 20)
    vmem_limit = int(min(vmem_cap_limit, max(32 * 1024 * 1024, need)))

    out = pl.pallas_call(
        _scse_gate_kernel,
        out_shape=jax.ShapeDtypeStruct((N, C, S), dtype),
        grid_spec=pltpu.PrefetchScalarGridSpec(
            num_scalar_prefetch=0,
            grid=(N, n_s_tiles),
            in_specs=[
                pl.BlockSpec((1, C, TS), lambda n, s: (n, 0, s)),  # U tile
                pl.BlockSpec((C, 1), lambda n, s: (0, 0)),         # w_s column
                pl.BlockSpec((1, C, 1), lambda n, s: (n, 0, 0)),   # cSE gate
            ],
            out_specs=pl.BlockSpec((1, C, TS), lambda n, s: (n, 0, s)),
        ),
        compiler_params=pltpu.CompilerParams(
            dimension_semantics=("parallel", "parallel"),
            vmem_limit_bytes=vmem_limit),
    )(x, ws_col, cgate)

    return out.reshape(N, C, D, H, W)


def scse_reference(u, w_s, w_sq, w_ex):
    """Pure-JAX reference mirroring the PyTorch forward (f32 math)."""
    u = u.astype(jnp.float32)
    # sSE
    q = jax.nn.sigmoid(jnp.einsum('oc,ncdhw->nodhw', w_s, u))      # (N,1,D,H,W)
    u_sse = u * q
    # cSE
    z = jnp.mean(u, axis=(2, 3, 4))                                # (N, C)
    z = jnp.einsum('oc,nc->no', w_sq, z)                           # (N, C//2)
    z = jnp.einsum('oc,nc->no', w_ex, z)                           # (N, C)
    z = jax.nn.sigmoid(z)[:, :, None, None, None]                  # (N,C,1,1,1)
    u_cse = u * z
    return u_sse + u_cse


def _make_inputs(key, N, C, D, H, W, dtype=jnp.float32):
    k_u, k_s, k_sq, k_ex = jax.random.split(key, 4)
    u = jax.random.normal(k_u, (N, C, D, H, W), dtype=jnp.float32).astype(dtype)
    w_s = 0.1 * jax.random.normal(k_s, (1, C), dtype=jnp.float32)
    w_sq = 0.1 * jax.random.normal(k_sq, (C // 2, C), dtype=jnp.float32)
    w_ex = 0.1 * jax.random.normal(k_ex, (C, C // 2), dtype=jnp.float32)
    return u, w_s, w_sq, w_ex


if __name__ == "__main__":
    key = jax.random.PRNGKey(0)
    k1, k2, k3 = jax.random.split(key, 3)

    # ---- Test 1: auto tile sizing, S = 192 (not a multiple of 128) ->
    # single tile whose block equals the full spatial dim; no pad, no slice.
    u, w_s, w_sq, w_ex = _make_inputs(k1, 2, 8, 3, 8, 8)
    out = jax.block_until_ready(scse_pallas(u, w_s, w_sq, w_ex))
    ref = scse_reference(u, w_s, w_sq, w_ex)
    assert out.shape == ref.shape == (2, 8, 3, 8, 8)
    assert jnp.allclose(out, ref, atol=1e-4, rtol=1e-4), "test1 mismatch"

    # ---- Test 2: forced multi-tile with a 128-aligned ragged last block
    # (S = 1280, TS = 512 -> blocks 512, 512, 256-masked).
    u2, w_s2, w_sq2, w_ex2 = _make_inputs(k2, 2, 16, 5, 16, 16)
    out2 = jax.block_until_ready(
        scse_pallas(u2, w_s2, w_sq2, w_ex2, target_tile_bytes=16 * 512 * 4))
    ref2 = scse_reference(u2, w_s2, w_sq2, w_ex2)
    assert jnp.allclose(out2, ref2, atol=1e-4, rtol=1e-4), "test2 mismatch"

    # ---- Test 3: forced multi-tile with a non-128-aligned ragged last block
    # (S = 300, TS = 128 -> blocks 128, 128, 44-masked).
    u3, w_s3, w_sq3, w_ex3 = _make_inputs(k3, 2, 8, 3, 10, 10)
    out3 = jax.block_until_ready(
        scse_pallas(u3, w_s3, w_sq3, w_ex3, target_tile_bytes=8 * 128 * 4))
    ref3 = scse_reference(u3, w_s3, w_sq3, w_ex3)
    assert jnp.allclose(out3, ref3, atol=1e-4, rtol=1e-4), "test3 mismatch"

    # ---- Test 4: bf16 I/O path (gate reduction in f32, gate apply in bf16).
    u_bf = u2.astype(jnp.bfloat16)
    out_bf = jax.block_until_ready(scse_pallas(u_bf, w_s2, w_sq2, w_ex2))
    assert out_bf.dtype == jnp.bfloat16
    assert jnp.allclose(out_bf.astype(jnp.float32), ref2,
                        atol=1e-1, rtol=1e-1), "bf16 mismatch"

    print("KERNEL_OK")
</pallas_src>

<mosaic_0001>
module attributes {stable_mosaic.version = 11 : i64} {
  func.func @_scse_gate_kernel(%arg0: i32, %arg1: i32, %arg2: memref<1x8x192xf32, #tpu.memory_space<vmem>>, %arg3: memref<8x1xf32, #tpu.memory_space<vmem>>, %arg4: memref<1x8x1xf32, #tpu.memory_space<vmem>>, %arg5: memref<1x8x192xf32, #tpu.memory_space<vmem>>) attributes {dimension_semantics = [#tpu.dimension_semantics<parallel>, #tpu.dimension_semantics<parallel>], iteration_bounds = array<i64: 2, 1>, scalar_prefetch = 0 : i64, scratch_operands = 0 : i64, tpu.core_type = #tpu.core_type<tc>, window_params = [{transform_indices = @transform_0, window_bounds = array<i64: 1, 8, 192>}, {pipeline_mode = #tpu.pipeline_mode<synchronous>, transform_indices = @transform_1, window_bounds = array<i64: 8, 1>}, {transform_indices = @transform_2, window_bounds = array<i64: 1, 8, 1>}, {transform_indices = @transform_3, window_bounds = array<i64: 1, 8, 192>}]} {
    %c0 = arith.constant 0 : index
    %c0_0 = arith.constant 0 : index
    %c0_1 = arith.constant 0 : index
    %0 = vector.load %arg2[%c0, %c0_0, %c0_1] : memref<1x8x192xf32, #tpu.memory_space<vmem>>, vector<1x8x192xf32>
    %1 = vector.shape_cast %0 : vector<1x8x192xf32> to vector<8x192xf32>
    %c0_2 = arith.constant 0 : index
    %c0_3 = arith.constant 0 : index
    %2 = vector.load %arg3[%c0_2, %c0_3] : memref<8x1xf32, #tpu.memory_space<vmem>>, vector<8x1xf32>
    %3 = vector.broadcast %2 : vector<8x1xf32> to vector<8x192xf32>
    %4 = arith.mulf %1, %3 : vector<8x192xf32>
    %cst = arith.constant dense<0.000000e+00> : vector<192xf32>
    %5 = vector.multi_reduction <add>, %4, %cst [0] : vector<8x192xf32> to vector<192xf32>
    %6 = vector.shape_cast %5 : vector<192xf32> to vector<1x192xf32>
    %7 = arith.negf %6 : vector<1x192xf32>
    %8 = math.exp %7 : vector<1x192xf32>
    %cst_4 = arith.constant 1.000000e+00 : f32
    %9 = vector.broadcast %cst_4 : f32 to vector<1x192xf32>
    %10 = arith.addf %9, %8 : vector<1x192xf32>
    %11 = arith.divf %9, %10 : vector<1x192xf32>
    %c0_5 = arith.constant 0 : index
    %c0_6 = arith.constant 0 : index
    %c0_7 = arith.constant 0 : index
    %12 = vector.load %arg4[%c0_5, %c0_6, %c0_7] : memref<1x8x1xf32, #tpu.memory_space<vmem>>, vector<1x8x1xf32>
    %13 = vector.shape_cast %12 : vector<1x8x1xf32> to vector<8x1xf32>
    %14 = vector.broadcast %11 : vector<1x192xf32> to vector<8x192xf32>
    %15 = vector.broadcast %13 : vector<8x1xf32> to vector<8x192xf32>
    %16 = arith.addf %14, %15 : vector<8x192xf32>
    %17 = arith.mulf %1, %16 : vector<8x192xf32>
    %c0_8 = arith.constant 0 : index
    %c0_9 = arith.constant 0 : index
    %c0_10 = arith.constant 0 : index
    %18 = vector.load %arg5[%c0_8, %c0_9, %c0_10] : memref<1x8x192xf32, #tpu.memory_space<vmem>>, vector<1x8x192xf32>
    %19 = vector.shape_cast %18 : vector<1x8x192xf32> to vector<8x192xf32>
    %20 = vector.shape_cast %17 : vector<8x192xf32> to vector<1x8x192xf32>
    tpu.vector_store %arg5[%c0_8, %c0_9, %c0_10], %20 {strides = array<i32>} : memref<1x8x192xf32, #tpu.memory_space<vmem>>, vector<1x8x192xf32>,
    return
  }
  func.func @transform_0(%arg0: i32, %arg1: i32) -> (i32, i32, i32) {
    %c0_i32 = arith.constant 0 : i32
    %c0_i32_0 = arith.constant 0 : i32
    return %arg0, %c0_i32, %arg1 : i32, i32, i32
  }
  func.func @transform_1(%arg0: i32, %arg1: i32) -> (i32, i32) {
    %c0_i32 = arith.constant 0 : i32
    %c0_i32_0 = arith.constant 0 : i32
    %c0_i32_1 = arith.constant 0 : i32
    return %c0_i32, %c0_i32_0 : i32, i32
  }
  func.func @transform_2(%arg0: i32, %arg1: i32) -> (i32, i32, i32) {
    %c0_i32 = arith.constant 0 : i32
    %c0_i32_0 = arith.constant 0 : i32
    %c0_i32_1 = arith.constant 0 : i32
    return %arg0, %c0_i32, %c0_i32_0 : i32, i32, i32
  }
  func.func @transform_3(%arg0: i32, %arg1: i32) -> (i32, i32, i32) {
    %c0_i32 = arith.constant 0 : i32
    %c0_i32_0 = arith.constant 0 : i32
    return %arg0, %c0_i32, %arg1 : i32, i32, i32
  }
}

</mosaic_0001>

<llo_original>
// kernel: tpu_custom_call.1
$region0: #{tpu_custom_call.1}
  #allocation0 [shape = 'u32[]', space=smem, size = 0x4, offset = 0x4, fixed_abs, tag = 'smem constant byte address 0x4 - core index']
  #allocation1 [shape = 'u32[144,128]{1,0:T(1,128)}', space=vmem, size = 0x12000, scoped, tag = 'internal scratch']
  %s0 = inlined_call_operand.hbm [shape: f32[2,8,192], index: 0, kind: input, shape index: {}]
  %s1 = inlined_call_operand.vmem [shape: f32[8,1], index: 1, kind: input, shape index: {}]
  %s2 = inlined_call_operand.vmem [shape: f32[2,8,1], index: 2, kind: input, shape index: {}]
  %s3 = inlined_call_operand.hbm [shape: f32[2,8,192], index: 3, kind: output, shape index: {}]
  %s4 = sld [smem:[#allocation0]]
  $region49: #{tpu_custom_call.1} parent=0
    _
  %s6 = ssub.s32 1, %s4
  %s7 = scalar_select 0, %s6, %s4
  $region1: #{tpu_custom_call.1} parent=0
    #allocation2 [shape = 'u8[16384]{0}', space=vmem, size = 0x4000, scoped, tag = 'input window, operand 0']
    #allocation3 [shape = 's32[2]{0}', space=sflag, size = 0x8, scoped, tag = 'scoped memory for tpu_custom_call.1']
    #allocation4 [shape = 's32[2]{0}', space=sflag, size = 0x8, scoped, tag = 'scoped memory for tpu_custom_call.1']
    #allocation5 [shape = 'u8[16384]{0}', space=vmem, size = 0x4000, scoped, tag = 'output window, operand 0']
    %8 = vsyncpa [#allocation3], 0
    %s9 = scalar_lea.sflag [#allocation3], 1
    %10 = vsyncpa %s9, 0
    %11 = vsyncpa [#allocation4], 0
    %s12 = scalar_lea.sflag [#allocation4], 1
    %13 = vsyncpa %s12, 0
    loop: start=0, step=1, limit=4
    $region2: #{tpu_custom_call.1} parent=1 // loop_pre_header
      _
    $region3: #{tpu_custom_call.1} parent=1 // loop_header
      %s15 = sphi 0, %s19
      %p16 = scmp.ge.s32.totalorder %s15, 4
      %s22 = sphi 0, %s34
      %s23 = sphi 0, %s30
      %s24 = sphi 0, %s22
      %s25 = sphi 0, %s23
      %s26 = sphi 0, %s24
      %s27 = sphi 0, %s25
      %s39 = sphi 0, %s41
      %s42 = sphi 0, %s39
      %s43 = sphi 0, %s42
      %s59 = sphi 0, %s43
      %s63 = sphi 0, %s63
      %s65 = sphi 0, %s63
      %s66 = sphi 0, %s65
      %s80 = sphi 0, %s66
      %s86 = sphi 0, %s88
      %s89 = sphi 0, %s86
      %s90 = sphi 0, %s89
      %s106 = sphi 0, %s90
      %s114 = sphi 0, %s116
      %s117 = sphi 0, %s114
      %s118 = sphi 0, %s117
      %s134 = sphi 0, %s118
    $region4: #{tpu_custom_call.1} parent=1 // loop_header_branch
      %18 = sbr.rel (%p16) target = $region8
    $region5: #{tpu_custom_call.1} parent=1 // loop_body
      %s20 = ssub.s32 %s15, 1
      %s21 = ssub.s32 %s15, 2
      %s28 = sadd.s32 1, %s23
      %p29 = scmp.ge.s32.totalorder %s28, 1
      %s30 = scalar_select %p29, 0, %s28
      %s31 = sadd.s32 1, %s22
      %s32 = scalar_select %p29, %s31, %s22
      %p33 = scmp.ge.s32.totalorder %s32, 2
      %s34 = scalar_select %p33, 0, %s32
      %s35 = ssub.s32 %s22, %s34
      %s36 = ssub.s32 %s23, %s30
      %s37 = sor.u32 %s35, %s36
      %p38 = scmp.eq.s32.totalorder %s37, 0
      %s40 = sadd.s32 %s39, 1
      %s41 = scalar_select %p38, %s39, %s40
      %p44 = pneg %p38
      %p45 = scmp.eq.s32.totalorder %s15, 1
      %p46 = por %p44, %p45
      %p47 = scmp.ne.s32.totalorder %s39, %s42
      %p48 = scmp.eq.s32.totalorder %s15, 0
      %p49 = por %p47, %p48
      %p50 = scmp.ne.s32.totalorder %s39, %s42
      %p51 = scmp.eq.s32.totalorder %s20, 1
      %p52 = por %p50, %p51
      %p53 = scmp.ne.s32.totalorder %s42, %s43
      %p54 = scmp.eq.s32.totalorder %s20, 0
      %p55 = por %p53, %p54
      %p56 = scmp.ne.s32.totalorder %s42, %s43
      %p57 = scmp.eq.s32.totalorder %s21, 1
      %p58 = por %p56, %p57
      %p60 = scmp.ne.s32.totalorder %s43, %s59
      %p61 = scmp.eq.s32.totalorder %s21, 0
      %p62 = por %p60, %p61
      %s64 = sadd.s32 %s63, 1
      %p67 = scmp.eq.s32.totalorder %s15, 1
      %p68 = scmp.ne.s32.totalorder %s63, %s65
      %p69 = scmp.eq.s32.totalorder %s15, 0
      %p70 = por %p68, %p69
      %p71 = scmp.ne.s32.totalorder %s63, %s65
      %p72 = scmp.eq.s32.totalorder %s20, 1
      %p73 = por %p71, %p72
      %p74 = scmp.ne.s32.totalorder %s65, %s66
      %p75 = scmp.eq.s32.totalorder %s20, 0
      %p76 = por %p74, %p75
      %p77 = scmp.ne.s32.totalorder %s65, %s66
      %p78 = scmp.eq.s32.totalorder %s21, 1
      %p79 = por %p77, %p78
      %p81 = scmp.ne.s32.totalorder %s66, %s80
      %p82 = scmp.eq.s32.totalorder %s21, 0
      %p83 = por %p81, %p82
      %s84 = ssub.s32 %s22, %s34
      %p85 = scmp.eq.s32.totalorder %s84, 0
      %s87 = sadd.s32 %s86, 1
      %s88 = scalar_select %p85, %s86, %s87
      %p91 = pneg %p85
      %p92 = scmp.eq.s32.totalorder %s15, 1
      %p93 = por %p91, %p92
      %p94 = scmp.ne.s32.totalorder %s86, %s89
      %p95 = scmp.eq.s32.totalorder %s15, 0
      %p96 = por %p94, %p95
      %p97 = scmp.ne.s32.totalorder %s86, %s89
      %p98 = scmp.eq.s32.totalorder %s20, 1
      %p99 = por %p97, %p98
      %p100 = scmp.ne.s32.totalorder %s89, %s90
      %p101 = scmp.eq.s32.totalorder %s20, 0
      %p102 = por %p100, %p101
      %p103 = scmp.ne.s32.totalorder %s89, %s90
      %p104 = scmp.eq.s32.totalorder %s21, 1
      %p105 = por %p103, %p104
      %p107 = scmp.ne.s32.totalorder %s90, %s106
      %p108 = scmp.eq.s32.totalorder %s21, 0
      %p109 = por %p107, %p108
      %s110 = ssub.s32 %s22, %s34
      %s111 = ssub.s32 %s23, %s30
      %s112 = sor.u32 %s110, %s111
      %p113 = scmp.eq.s32.totalorder %s112, 0
      %s115 = sadd.s32 %s114, 1
      %s116 = scalar_select %p113, %s114, %s115
      %p119 = pneg %p113
      %p120 = scmp.eq.s32.totalorder %s15, 1
      %p121 = por %p119, %p120
      %p122 = scmp.ne.s32.totalorder %s114, %s117
      %p123 = scmp.eq.s32.totalorder %s15, 0
      %p124 = por %p122, %p123
      %p125 = scmp.ne.s32.totalorder %s114, %s117
      %p126 = scmp.eq.s32.totalorder %s20, 1
      %p127 = por %p125, %p126
      %p128 = scmp.ne.s32.totalorder %s117, %s118
      %p129 = scmp.eq.s32.totalorder %s20, 0
      %p130 = por %p128, %p129
      %p131 = scmp.ne.s32.totalorder %s117, %s118
      %p132 = scmp.eq.s32.totalorder %s21, 1
      %p133 = por %p131, %p132
      %p135 = scmp.ne.s32.totalorder %s118, %s134
      %p136 = scmp.eq.s32.totalorder %s21, 0
      %p137 = por %p135, %p136
      %p138 = scmp.le.s32.totalorder 1, %s15
      %p139 = scmp.lt.s32.totalorder %s15, 3
      %p140 = pnand %p138, %p139
      %p141 = pneg %p140
      // Predicated region
      $region9: #{tpu_custom_call.1} parent=5 // pred_check
        _
      $region10: #{tpu_custom_call.1} parent=5 // pred_check_branch
        %143 = sbr.rel (%p140) target = $region12
      $region11: #{tpu_custom_call.1} parent=5 // pred_region
        %s144 = ssub.s32 %s15, 1
        // Predicated region
        $region13: #{tpu_custom_call.1} parent=11 // pred_check
          %p145 = pneg %p76
        $region14: #{tpu_custom_call.1} parent=11 // pred_check_branch
          %147 = sbr.rel (%p145) target = $region16
        $region15: #{tpu_custom_call.1} parent=11 // pred_region
          _
        $region16: #{tpu_custom_call.1} parent=11 // pred_fallthru
          _
      $region12: #{tpu_custom_call.1} parent=5 // pred_fallthru
        _
      %p148 = scmp.lt.s32.totalorder %s15, 2
      // Predicated region
      $region17: #{tpu_custom_call.1} parent=5 // pred_check
        %p149 = pneg %p148
      $region18: #{tpu_custom_call.1} parent=5 // pred_check_branch
        %151 = sbr.rel (%p149) target = $region20
      $region19: #{tpu_custom_call.1} parent=5 // pred_region
        // Predicated region
        $region21: #{tpu_custom_call.1} parent=19 // pred_check
          %p152 = pneg %p49
        $region22: #{tpu_custom_call.1} parent=19 // pred_check_branch
          %154 = sbr.rel (%p152) target = $region24
        $region23: #{tpu_custom_call.1} parent=19 // pred_region
          %s155 = sand.u32 %s39, 1
          %s156 = scalar_lea.sflag [#allocation3], %s155
          %s157 = sand.u32 %s39, 1
          %s158 = smul.addr %s157, 16
          %s159 = scalar_lea.vmem [#allocation2], %s158
          %s160 = smul.u32 2, %s23
          %s162 = ssub.s32 256, 256
          %163 = vsyncadd %s156, %s162
          %s164 = smul.addr %s22, 2
          %s165 = sadd.s32 %s160, %s164
          %s166 = smul.addr %s165, 128
          %s167 = scalar_lea.hbm %s0, %s166
          %s169 = sshll.u32 %s159, 4
          %s170 = int_to_ptr.vmem [resolvable:$true] %s169
          %172 = dma.hbm_to_vmem [thread:$0]  %s167, 256, %s170, %s156
        $region24: #{tpu_custom_call.1} parent=19 // pred_fallthru
          _
        // Predicated region
        $region25: #{tpu_custom_call.1} parent=19 // pred_check
          %p173 = pneg %p96
        $region26: #{tpu_custom_call.1} parent=19 // pred_check_branch
          %175 = sbr.rel (%p173) target = $region28
        $region27: #{tpu_custom_call.1} parent=19 // pred_region
          %p176 = scmp.lt.s32.totalorder %s22, 1
          %s177 = scalar_select %p176, %s22, 1
          %s178 = smul.addr %s177, 8
          %s179 = scalar_lea.vmem %s2, %s178
        $region28: #{tpu_custom_call.1} parent=19 // pred_fallthru
          _
      $region20: #{tpu_custom_call.1} parent=5 // pred_fallthru
        _
      %p180 = scmp.le.s32.totalorder 1, %s15
      %p181 = scmp.lt.s32.totalorder %s15, 3
      %p182 = pnand %p180, %p181
      %p183 = pneg %p182
      // Predicated region
      $region29: #{tpu_custom_call.1} parent=5 // pred_check
        _
      $region30: #{tpu_custom_call.1} parent=5 // pred_check_branch
        %185 = sbr.rel (%p182) target = $region32
      $region31: #{tpu_custom_call.1} parent=5 // pred_region
        %s186 = ssub.s32 %s15, 1
        %s187 = sand.u32 %s42, 1
        %s188 = scalar_lea.sflag [#allocation3], %s187
        %s189 = sand.u32 %s42, 1
        %s190 = smul.addr %s189, 16
        %s191 = scalar_lea.vmem [#allocation2], %s190
        // Predicated region
        $region33: #{tpu_custom_call.1} parent=31 // pred_check
          %p192 = pneg %p55
        $region34: #{tpu_custom_call.1} parent=31 // pred_check_branch
          %194 = sbr.rel (%p192) target = $region36
        $region35: #{tpu_custom_call.1} parent=31 // pred_region
          %195 = dma.done %s188, 256
        $region36: #{tpu_custom_call.1} parent=31 // pred_fallthru
          _
        %s196 = sand.u32 %s42, 1
        %s197 = scalar_lea.sflag [#allocation3], %s196
        %s198 = sand.u32 %s42, 1
        %s199 = smul.addr %s198, 16
        %s200 = scalar_lea.vmem [#allocation2], %s199
        %p201 = pneg %p55
        %p202 = pneg %p52
        %p203 = pneg %p76
        %p204 = pneg %p73
        %p205 = scmp.lt.s32.totalorder %s24, 1
        %s206 = scalar_select %p205, %s24, 1
        %s207 = smul.addr %s206, 8
        %s208 = scalar_lea.vmem %s2, %s207
        %p209 = pneg %p102
        %p210 = pneg %p99
        %p211 = pneg %p130
        %p212 = pneg %p127
        %s213 = sand.u32 %s117, 1
        %s214 = scalar_lea.sflag [#allocation4], %s213
        %s215 = sand.u32 %s117, 1
        %s216 = smul.addr %s215, 16
        %s217 = scalar_lea.vmem [#allocation5], %s216
        %s218 = smul.u32 2, %s25
        %p219 = scmp.lt.s32.totalorder %s24, 1
        %s220 = scalar_select %p219, %s24, 1
        %s221 = smul.addr %s220, 8
        %s222 = scalar_lea.vmem %s2, %s221
        %s223 = smul.u32 2, %s25
        %v224 = vld [vmem:[%s191] sm:$0xff]
        %v225 = vld [vmem:[%s191 + $0x8] sm:$0xff]
        %v226 = vld [vmem:[%s1] sm:$0xff]
        %228 = vset.pattern.permute.xlu0 0
        %229 = vperm.xlu0 %228, %v226
        %v230 = vpop.permute.xlu0 %229
        %v232 = vmul.f32 %v224, %v230
        %v233 = vmul.f32 %v225, %v230
        %v234 = vrot.slane %v232, 4
        %v235 = vadd.f32 %v232, %v234
        %v236 = vrot.slane %v235, 2
        %v237 = vadd.f32 %v235, %v236
        %v238 = vrot.slane %v237, 1
        %v239 = vadd.f32 %v237, %v238
        %vm240 = vcmask 523264
        %v241 = vsel %vm240, %v233, 0.0
        %v242 = vrot.slane %v241, 4
        %v243 = vadd.f32 %v241, %v242
        %v244 = vrot.slane %v243, 2
        %v245 = vadd.f32 %v243, %v244
        %v246 = vrot.slane %v245, 1
        %v247 = vadd.f32 %v245, %v246
        %v248 = vxor.u32 %v239, 2147483648
        %v249 = vxor.u32 %v247, 2147483648
        %v250 = vmul.f32 %v248, 1.442695
        %v251 = vpow.pop %v250
        %v252 = vmul.f32 %v249, 1.442695
        %v253 = vpow.pop %v252
        %v254 = vadd.f32 %v251, 1.0
        %v255 = vadd.f32 %v253, 1.0
        %v256 = vrcp.pop %v254
        %v257 = vmul.f32 1.0, %v256
        %v258 = vrcp.pop %v255
        %v259 = vmul.f32 1.0, %v258
        %v260 = vld [vmem:[%s222] sm:$0xff]
        %262 = vset.pattern.permute.xlu0 0
        %263 = vperm.xlu0 %262, %v260
        %v264 = vpop.permute.xlu0 %263
        %v266 = vadd.f32 %v257, %v264
        %v267 = vadd.f32 %v259, %v264
        %v268 = vmul.f32 %v224, %v266
        %v269 = vmul.f32 %v225, %v267
        %270 = vst [vmem:[%s217] sm:$0xff] %v268
        %271 = vst.msk [vmem:[%s217 + $0x8] sm:$0xff] %vm240, %v269
        %s272 = sand.u32 %s117, 1
        %s273 = scalar_lea.sflag [#allocation4], %s272
        %s274 = sand.u32 %s117, 1
        %s275 = smul.addr %s274, 16
        %s276 = scalar_lea.vmem [#allocation5], %s275
        // Predicated region
        $region37: #{tpu_custom_call.1} parent=31 // pred_check
          %p277 = pneg %p127
        $region38: #{tpu_custom_call.1} parent=31 // pred_check_branch
          %279 = sbr.rel (%p277) target = $region40
        $region39: #{tpu_custom_call.1} parent=31 // pred_region
          %s280 = smul.u32 2, %s25
          %s282 = ssub.s32 256, 256
          %283 = vsyncadd %s273, %s282
          %s284 = smul.addr %s24, 2
          %s285 = sadd.s32 %s280, %s284
          %s286 = smul.addr %s285, 128
          %s287 = scalar_lea.hbm %s3, %s286
          %s289 = sshll.u32 %s276, 4
          %s290 = int_to_ptr.vmem [resolvable:$true] %s289
          %292 = dma.vmem_to_hbm [thread:$0]  %s290, 256, %s287, %s273
        $region40: #{tpu_custom_call.1} parent=31 // pred_fallthru
          _
      $region32: #{tpu_custom_call.1} parent=5 // pred_fallthru
        _
      %p293 = scmp.le.s32.totalorder 2, %s15
      // Predicated region
      $region41: #{tpu_custom_call.1} parent=5 // pred_check
        %p294 = pneg %p293
      $region42: #{tpu_custom_call.1} parent=5 // pred_check_branch
        %296 = sbr.rel (%p294) target = $region44
      $region43: #{tpu_custom_call.1} parent=5 // pred_region
        %s297 = ssub.s32 %s15, 2
        // Predicated region
        $region45: #{tpu_custom_call.1} parent=43 // pred_check
          %p298 = pneg %p133
        $region46: #{tpu_custom_call.1} parent=43 // pred_check_branch
          %300 = sbr.rel (%p298) target = $region48
        $region47: #{tpu_custom_call.1} parent=43 // pred_region
          %s301 = sand.u32 %s118, 1
          %s302 = scalar_lea.sflag [#allocation4], %s301
          %s303 = sand.u32 %s118, 1
          %s304 = smul.addr %s303, 16
          %s305 = scalar_lea.vmem [#allocation5], %s304
          %306 = dma.done %s302, 256
        $region48: #{tpu_custom_call.1} parent=43 // pred_fallthru
          _
      $region44: #{tpu_custom_call.1} parent=5 // pred_fallthru
        _
    $region6: #{tpu_custom_call.1} parent=1 // loop_footer
      %s19 = sadd.s32 1, %s15
    $region7: #{tpu_custom_call.1} parent=1 // loop_footer_branch
      %14 = sbr.rel target = $region3
    $region8: #{tpu_custom_call.1} parent=1 // loop_exit
      _
    %307 = vsyncpa [#allocation3], 1
    %s308 = scalar_lea.sflag [#allocation3], 1
    %309 = vsyncpa %s308, 1
    %310 = vsyncpa [#allocation4], 1
    %s311 = scalar_lea.sflag [#allocation4], 1
    %312 = vsyncpa %s311, 1

</llo_original>
